<compile_context>
chip_gen: v5e
topology: v5e:2x2
jax: 0.10.0
libtpu: 0.0.40
codegen_flags: <defaults>
</compile_context>

<pallas_src>
import math

import jax
import jax.numpy as jnp
from jax.experimental import pallas as pl
from jax.experimental.pallas import tpu as pltpu


def _round_up(x, m):
    return ((x + m - 1) // m) * m


def _qnet_kernel(x_ref, w1_ref, b1_ref, w2_ref, b2_ref, o_ref):
    # One batch tile per grid step; weights/biases are VMEM-resident blocks
    # (constant index_maps -> fetched once, reused every step).
    x = x_ref[...]                                          # (TB, In)
    h = jnp.dot(x, w1_ref[...],
                preferred_element_type=jnp.float32)         # (TB, H_p) on MXU
    h = jnp.maximum(h + b1_ref[...], 0.0)                   # bias + ReLU (VPU)
    y = jnp.dot(h, w2_ref[...],
                preferred_element_type=jnp.float32)         # (TB, Out)
    o_ref[...] = (y + b2_ref[...]).astype(o_ref.dtype)


def prepare_params(w1, b1, w2, b2):
    """Pad ONLY the hidden dim to the 128-lane width, once, outside the
    forward path.  Zero padding is inert: padded hidden units are
    relu(x@0 + 0) = 0 and multiply zero rows of W2."""
    H = w1.shape[1]
    H_p = _round_up(H, 128)
    w1p = jnp.pad(w1, ((0, 0), (0, H_p - H)))               # (In, H_p)
    b1p = jnp.pad(b1, ((0, 0), (0, H_p - H)))               # (1, H_p)
    w2p = jnp.pad(w2, ((0, H_p - H), (0, 0)))               # (H_p, Out)
    return w1p, b1p, w2p, b2                                 # b2 stays (1, Out)


def linear_qnet_forward(x, w1p, b1p, w2p, b2, *, max_block_b=2048):
    """x: (B, In) f32; padded params from prepare_params()."""
    B, In = x.shape
    H_p = w1p.shape[1]
    Out = w2p.shape[1]

    # Batch tiling: cdiv-based split keeps per-tile padding < 8 rows.
    # Force >= 2 grid steps when there is enough batch to split (>= 16 rows)
    # so both TensorCores are used on v7x; tiny batches use one full-extent
    # block (no batch padding at all).
    num_tiles = max(pl.cdiv(B, max_block_b), 2 if B >= 16 else 1)
    if num_tiles == 1:
        TB = B                       # full-dim block: legal even if not %8
    else:
        TB = _round_up(pl.cdiv(B, num_tiles), 8)
    B_p = num_tiles * TB

    xp = jnp.pad(x, ((0, B_p - B), (0, 0))) if B_p != B else x

    grid = (num_tiles,)

    cost = pl.CostEstimate(
        flops=2 * B_p * (In * H_p + H_p * Out),
        transcendentals=0,
        bytes_accessed=4 * (B_p * In + In * H_p + H_p
                            + H_p * Out + Out + B_p * Out),
    )

    out_p = pl.pallas_call(
        _qnet_kernel,
        out_shape=jax.ShapeDtypeStruct((B_p, Out), x.dtype),
        grid=grid,
        in_specs=[
            pl.BlockSpec((TB, In), lambda i: (i, 0)),       # streamed batch tile
            pl.BlockSpec((In, H_p), lambda i: (0, 0)),      # resident W1
            pl.BlockSpec((1, H_p), lambda i: (0, 0)),       # resident b1
            pl.BlockSpec((H_p, Out), lambda i: (0, 0)),     # resident W2
            pl.BlockSpec((1, Out), lambda i: (0, 0)),       # resident b2
        ],
        out_specs=pl.BlockSpec((TB, Out), lambda i: (i, 0)),
        compiler_params=pltpu.CompilerParams(
            dimension_semantics=("parallel",)),
        cost_estimate=cost,
    )(xp, w1p, b1p, w2p, b2)

    return out_p[:B] if B_p != B else out_p


def init_params(key, input_size, hidden_size, output_size):
    """Deterministic init mimicking PyTorch nn.Linear default:
    U(-1/sqrt(fan_in), 1/sqrt(fan_in)) for both weight and bias.
    Weights are stored as (in_features, out_features) so the kernel is x@W+b."""
    k1, k2, k3, k4 = jax.random.split(key, 4)
    bound1 = 1.0 / math.sqrt(input_size)
    bound2 = 1.0 / math.sqrt(hidden_size)
    w1 = jax.random.uniform(k1, (input_size, hidden_size),
                            minval=-bound1, maxval=bound1, dtype=jnp.float32)
    b1 = jax.random.uniform(k2, (1, hidden_size),
                            minval=-bound1, maxval=bound1, dtype=jnp.float32)
    w2 = jax.random.uniform(k3, (hidden_size, output_size),
                            minval=-bound2, maxval=bound2, dtype=jnp.float32)
    b2 = jax.random.uniform(k4, (1, output_size),
                            minval=-bound2, maxval=bound2, dtype=jnp.float32)
    return w1, b1, w2, b2


# TODO(synk): Linear_QNet.save() (torch.save checkpointing) is host-side I/O
# and has no Pallas equivalent; only the forward pass is implemented.


if __name__ == "__main__":
    # Small shapes consistent with the module (snake Q-net sized MLP).
    batch, input_size, hidden_size, output_size = 2, 16, 32, 4

    key = jax.random.PRNGKey(0)
    k_x, k_p, k_xl = jax.random.split(key, 3)
    x = jax.random.normal(k_x, (batch, input_size), dtype=jnp.float32)
    w1, b1, w2, b2 = init_params(k_p, input_size, hidden_size, output_size)

    # Pad weights ONCE, outside the per-step forward path.
    w1p, b1p, w2p, b2p = prepare_params(w1, b1, w2, b2)

    out = linear_qnet_forward(x, w1p, b1p, w2p, b2p)
    out = jax.block_until_ready(out)

    ref = jnp.maximum(x @ w1 + b1, 0.0) @ w2 + b2
    assert out.shape == (batch, output_size)
    assert jnp.allclose(out, ref, atol=1e-5, rtol=1e-5)

    # Batched path: exercises the multi-step batch grid + pipelining
    # (grid=(2,), so both TensorCores get a tile on v7x).
    xl = jax.random.normal(k_xl, (1024, input_size), dtype=jnp.float32)
    out_l = jax.block_until_ready(linear_qnet_forward(xl, w1p, b1p, w2p, b2p))
    ref_l = jnp.maximum(xl @ w1 + b1, 0.0) @ w2 + b2
    assert out_l.shape == (1024, output_size)
    assert jnp.allclose(out_l, ref_l, atol=1e-5, rtol=1e-5)

    # Odd batch: cdiv-based tiling pads < 8 rows per tile (600 -> 608, not 1024).
    xm = jax.random.normal(k_xl, (600, input_size), dtype=jnp.float32)
    out_m = jax.block_until_ready(linear_qnet_forward(xm, w1p, b1p, w2p, b2p))
    ref_m = jnp.maximum(xm @ w1 + b1, 0.0) @ w2 + b2
    assert out_m.shape == (600, output_size)
    assert jnp.allclose(out_m, ref_m, atol=1e-5, rtol=1e-5)

    print("KERNEL_OK")
</pallas_src>

<mosaic_0001>
module attributes {stable_mosaic.version = 11 : i64} {
  func.func @_qnet_kernel(%arg0: i32, %arg1: memref<2x16xf32, #tpu.memory_space<vmem>>, %arg2: memref<16x128xf32, #tpu.memory_space<vmem>>, %arg3: memref<1x128xf32, #tpu.memory_space<vmem>>, %arg4: memref<128x4xf32, #tpu.memory_space<vmem>>, %arg5: memref<1x4xf32, #tpu.memory_space<vmem>>, %arg6: memref<2x4xf32, #tpu.memory_space<vmem>>) attributes {dimension_semantics = [#tpu.dimension_semantics<parallel>], iteration_bounds = array<i64: 1>, scalar_prefetch = 0 : i64, scratch_operands = 0 : i64, tpu.core_type = #tpu.core_type<tc>, window_params = [{transform_indices = @transform_0, window_bounds = array<i64: 2, 16>}, {pipeline_mode = #tpu.pipeline_mode<synchronous>, transform_indices = @transform_1, window_bounds = array<i64: 16, 128>}, {pipeline_mode = #tpu.pipeline_mode<synchronous>, transform_indices = @transform_2, window_bounds = array<i64: 1, 128>}, {pipeline_mode = #tpu.pipeline_mode<synchronous>, transform_indices = @transform_3, window_bounds = array<i64: 128, 4>}, {pipeline_mode = #tpu.pipeline_mode<synchronous>, transform_indices = @transform_4, window_bounds = array<i64: 1, 4>}, {transform_indices = @transform_5, window_bounds = array<i64: 2, 4>}]} {
    %c0 = arith.constant 0 : index
    %c0_0 = arith.constant 0 : index
    %0 = vector.load %arg1[%c0, %c0_0] : memref<2x16xf32, #tpu.memory_space<vmem>>, vector<2x16xf32>
    %c0_1 = arith.constant 0 : index
    %c0_2 = arith.constant 0 : index
    %1 = vector.load %arg2[%c0_1, %c0_2] : memref<16x128xf32, #tpu.memory_space<vmem>>, vector<16x128xf32>
    %cst = arith.constant dense<0.000000e+00> : vector<2x128xf32>
    %2 = tpu.matmul %0, %1, %cst {dimension_numbers = #tpu.dot_dimension_numbers<[1], [0], [0], [1], [0, 0, 1, 1], [], []>} : vector<2x16xf32>, vector<16x128xf32>, vector<2x128xf32> -> vector<2x128xf32>
    %c0_3 = arith.constant 0 : index
    %c0_4 = arith.constant 0 : index
    %3 = vector.load %arg3[%c0_3, %c0_4] : memref<1x128xf32, #tpu.memory_space<vmem>>, vector<1x128xf32>
    %4 = vector.broadcast %3 : vector<1x128xf32> to vector<2x128xf32>
    %5 = arith.addf %2, %4 : vector<2x128xf32>
    %cst_5 = arith.constant 0.000000e+00 : f32
    %6 = vector.broadcast %cst_5 : f32 to vector<2x128xf32>
    %7 = arith.maximumf %5, %6 : vector<2x128xf32>
    %c0_6 = arith.constant 0 : index
    %c0_7 = arith.constant 0 : index
    %8 = vector.load %arg4[%c0_6, %c0_7] : memref<128x4xf32, #tpu.memory_space<vmem>>, vector<128x4xf32>
    %cst_8 = arith.constant dense<0.000000e+00> : vector<2x4xf32>
    %9 = tpu.matmul %7, %8, %cst_8 {dimension_numbers = #tpu.dot_dimension_numbers<[1], [0], [0], [1], [0, 0, 1, 1], [], []>} : vector<2x128xf32>, vector<128x4xf32>, vector<2x4xf32> -> vector<2x4xf32>
    %c0_9 = arith.constant 0 : index
    %c0_10 = arith.constant 0 : index
    %10 = vector.load %arg5[%c0_9, %c0_10] : memref<1x4xf32, #tpu.memory_space<vmem>>, vector<1x4xf32>
    %11 = vector.broadcast %10 : vector<1x4xf32> to vector<2x4xf32>
    %12 = arith.addf %9, %11 : vector<2x4xf32>
    %c0_11 = arith.constant 0 : index
    %c0_12 = arith.constant 0 : index
    %13 = vector.load %arg6[%c0_11, %c0_12] : memref<2x4xf32, #tpu.memory_space<vmem>>, vector<2x4xf32>
    tpu.vector_store %arg6[%c0_11, %c0_12], %12 {strides = array<i32>} : memref<2x4xf32, #tpu.memory_space<vmem>>, vector<2x4xf32>,
    return
  }
  func.func @transform_0(%arg0: i32) -> (i32, i32) {
    %c0_i32 = arith.constant 0 : i32
    %c0_i32_0 = arith.constant 0 : i32
    return %arg0, %c0_i32 : i32, i32
  }
  func.func @transform_1(%arg0: i32) -> (i32, i32) {
    %c0_i32 = arith.constant 0 : i32
    %c0_i32_0 = arith.constant 0 : i32
    %c0_i32_1 = arith.constant 0 : i32
    return %c0_i32, %c0_i32_0 : i32, i32
  }
  func.func @transform_2(%arg0: i32) -> (i32, i32) {
    %c0_i32 = arith.constant 0 : i32
    %c0_i32_0 = arith.constant 0 : i32
    %c0_i32_1 = arith.constant 0 : i32
    return %c0_i32, %c0_i32_0 : i32, i32
  }
  func.func @transform_3(%arg0: i32) -> (i32, i32) {
    %c0_i32 = arith.constant 0 : i32
    %c0_i32_0 = arith.constant 0 : i32
    %c0_i32_1 = arith.constant 0 : i32
    return %c0_i32, %c0_i32_0 : i32, i32
  }
  func.func @transform_4(%arg0: i32) -> (i32, i32) {
    %c0_i32 = arith.constant 0 : i32
    %c0_i32_0 = arith.constant 0 : i32
    %c0_i32_1 = arith.constant 0 : i32
    return %c0_i32, %c0_i32_0 : i32, i32
  }
  func.func @transform_5(%arg0: i32) -> (i32, i32) {
    %c0_i32 = arith.constant 0 : i32
    %c0_i32_0 = arith.constant 0 : i32
    return %arg0, %c0_i32 : i32, i32
  }
}

</mosaic_0001>

<llo_original>
// kernel: tpu_custom_call.1
$region0: #{tpu_custom_call.1}
  #allocation0 [shape = 'u32[]', space=smem, size = 0x4, offset = 0x4, fixed_abs, tag = 'smem constant byte address 0x4 - core index']
  #allocation1 [shape = 'u32[72,128]{1,0:T(1,128)}', space=vmem, size = 0x9000, scoped, tag = 'internal scratch']
  %s0 = inlined_call_operand.vmem [shape: f32[2,16], index: 0, kind: input, shape index: {}]
  %s1 = inlined_call_operand.vmem [shape: f32[16,128], index: 1, kind: input, shape index: {}]
  %s2 = inlined_call_operand.vmem [shape: f32[1,128], index: 2, kind: input, shape index: {}]
  %s3 = inlined_call_operand.vmem [shape: f32[128,4], index: 3, kind: input, shape index: {}]
  %s4 = inlined_call_operand.vmem [shape: f32[1,4], index: 4, kind: input, shape index: {}]
  %s5 = inlined_call_operand.hbm [shape: f32[2,4], index: 5, kind: output, shape index: {}]
  %s6 = sld [smem:[#allocation0]]
  $region30: #{tpu_custom_call.1} parent=0
    _
  %s8 = ssub.s32 1, %s6
  %s9 = scalar_select 0, %s8, %s6
  $region1: #{tpu_custom_call.1} parent=0
    #allocation2 [shape = 'u8[1024]{0}', space=vmem, size = 0x400, scoped, tag = 'output window, operand 0, single buffered']
    #allocation3 [shape = 's32[1]{0}', space=sflag, size = 0x4, scoped, tag = 'scoped memory for tpu_custom_call.1']
    %10 = vsyncpa [#allocation3], 0
    // Predicated region
    $region2: #{tpu_custom_call.1} parent=1 // pred_check
      _
    $region3: #{tpu_custom_call.1} parent=1 // pred_check_branch
      %12 = sbr.rel (0) target = $region5
    $region4: #{tpu_custom_call.1} parent=1 // pred_region
      _
    $region5: #{tpu_custom_call.1} parent=1 // pred_fallthru
      _
    // Predicated region
    $region6: #{tpu_custom_call.1} parent=1 // pred_check
      _
    $region7: #{tpu_custom_call.1} parent=1 // pred_check_branch
      %14 = sbr.rel (0) target = $region9
    $region8: #{tpu_custom_call.1} parent=1 // pred_region
      _
    $region9: #{tpu_custom_call.1} parent=1 // pred_fallthru
      _
    // Predicated region
    $region10: #{tpu_custom_call.1} parent=1 // pred_check
      _
    $region11: #{tpu_custom_call.1} parent=1 // pred_check_branch
      %16 = sbr.rel (0) target = $region13
    $region12: #{tpu_custom_call.1} parent=1 // pred_region
      _
    $region13: #{tpu_custom_call.1} parent=1 // pred_fallthru
      _
    // Predicated region
    $region14: #{tpu_custom_call.1} parent=1 // pred_check
      _
    $region15: #{tpu_custom_call.1} parent=1 // pred_check_branch
      %18 = sbr.rel (0) target = $region17
    $region16: #{tpu_custom_call.1} parent=1 // pred_region
      _
    $region17: #{tpu_custom_call.1} parent=1 // pred_fallthru
      _
    // Predicated region
    $region18: #{tpu_custom_call.1} parent=1 // pred_check
      _
    $region19: #{tpu_custom_call.1} parent=1 // pred_check_branch
      %20 = sbr.rel (0) target = $region21
    $region20: #{tpu_custom_call.1} parent=1 // pred_region
      _
    $region21: #{tpu_custom_call.1} parent=1 // pred_fallthru
      _
    %v21 = vld [vmem:[%s0] sm:$0x3]
    %v22 = vld [vmem:[%s1] sm:$0xff]
    %v23 = vld [vmem:[%s1 + $0x8] sm:$0xff]
    %v24 = vld [vmem:[%s2] sm:$0x1]
    %v26 = vperm.slane %v24, 0
    %vm28 = vcmask 130048
    %v30 = vsel %vm28, %v21, 0
    %32 = vmatpush.msra.mxu0 0.0
    %33 = vmatpush.msra.mxu0 0.0
    %34 = vmatpush.msra.mxu0 0.0
    %35 = vmatpush.msra.mxu0 0.0
    %36 = vmatpush.msra.mxu0 0.0
    %37 = vmatpush.msra.mxu0 0.0
    %38 = vmatpush.msra.mxu0 0.0
    %39 = vmatpush.msra.mxu0 0.0
    %40 = vmatpush.msra.mxu0 0.0
    %41 = vmatpush.msra.mxu0 0.0
    %42 = vmatpush.msra.mxu0 0.0
    %43 = vmatpush.msra.mxu0 0.0
    %44 = vmatpush.msra.mxu0 0.0
    %45 = vmatpush.msra.mxu0 0.0
    %46 = vmatpush.msra.mxu0 %v23
    %47 = vmatpush.msra.mxu0 %v22
    %48 = vmatmul.f32.gmra.mxu0 %v30
    %v49 = vpop.f32.mrf.mxu0
    %v50 = vadd.f32 %v26, %v49
    %51 = vdwg.mxu0
    %v52 = vmax.f32 %v50, 0.0
    %v53 = vld [vmem:[%s3] sm:$0xff]
    %v54 = vld [vmem:[%s3 + $0x8] sm:$0xff]
    %v55 = vld [vmem:[%s3 + $0x10] sm:$0xff]
    %v56 = vld [vmem:[%s3 + $0x18] sm:$0xff]
    %v57 = vld [vmem:[%s3 + $0x20] sm:$0xff]
    %v58 = vld [vmem:[%s3 + $0x28] sm:$0xff]
    %v59 = vld [vmem:[%s3 + $0x30] sm:$0xff]
    %v60 = vld [vmem:[%s3 + $0x38] sm:$0xff]
    %v61 = vld [vmem:[%s3 + $0x40] sm:$0xff]
    %v62 = vld [vmem:[%s3 + $0x48] sm:$0xff]
    %v63 = vld [vmem:[%s3 + $0x50] sm:$0xff]
    %v64 = vld [vmem:[%s3 + $0x58] sm:$0xff]
    %v65 = vld [vmem:[%s3 + $0x60] sm:$0xff]
    %v66 = vld [vmem:[%s3 + $0x68] sm:$0xff]
    %v67 = vld [vmem:[%s3 + $0x70] sm:$0xff]
    %v68 = vld [vmem:[%s3 + $0x78] sm:$0xff]
    %v69 = vld [vmem:[%s4] sm:$0x1]
    %v71 = vperm.slane %v69, 0
    %73 = vmatpush.msra.mxu0 %v68
    %74 = vmatpush.msra.mxu0 %v67
    %75 = vmatpush.msra.mxu0 %v66
    %76 = vmatpush.msra.mxu0 %v65
    %77 = vmatpush.msra.mxu0 %v64
    %78 = vmatpush.msra.mxu0 %v63
    %79 = vmatpush.msra.mxu0 %v62
    %80 = vmatpush.msra.mxu0 %v61
    %81 = vmatpush.msra.mxu0 %v60
    %82 = vmatpush.msra.mxu0 %v59
    %83 = vmatpush.msra.mxu0 %v58
    %84 = vmatpush.msra.mxu0 %v57
    %85 = vmatpush.msra.mxu0 %v56
    %86 = vmatpush.msra.mxu0 %v55
    %87 = vmatpush.msra.mxu0 %v54
    %88 = vmatpush.msra.mxu0 %v53
    %89 = vmatmul.f32.gmra.mxu0 %v52
    %v90 = vpop.f32.mrf.mxu0
    %v91 = vadd.f32 %v71, %v90
    %92 = vdwg.mxu0
    %vm93 = vcmask 25600
    %94 = vst.msk [vmem:[#allocation2] sm:$0x3] %vm93, %v91
    // Predicated region
    $region22: #{tpu_custom_call.1} parent=1 // pred_check
      _
    $region23: #{tpu_custom_call.1} parent=1 // pred_check_branch
      %96 = sbr.rel (0) target = $region25
    $region24: #{tpu_custom_call.1} parent=1 // pred_region
      %98 = vsyncadd [#allocation3], 0
      %s100 = sshll.u32 [#allocation2], 4
      %s101 = int_to_ptr.vmem [resolvable:$true] %s100
      %s102 = sshll.u32 %s5, 4
      %s103 = int_to_ptr.hbm [resolvable:$true] %s102
      %105 = dma.vmem_to_hbm [thread:$0]  %s101, 32, %s103, [#allocation3]
    $region25: #{tpu_custom_call.1} parent=1 // pred_fallthru
      _
    // Predicated region
    $region26: #{tpu_custom_call.1} parent=1 // pred_check
      _
    $region27: #{tpu_custom_call.1} parent=1 // pred_check_branch
      %107 = sbr.rel (0) target = $region29
    $region28: #{tpu_custom_call.1} parent=1 // pred_region
      %109 = dma.done [#allocation3], 32
    $region29: #{tpu_custom_call.1} parent=1 // pred_fallthru
      _
    %110 = vsyncpa [#allocation3], 1

</llo_original>
